<compile_context>
chip_gen: v7x
topology: tpu7x:2x2x1
jax: 0.10.0
libtpu: 0.0.40
codegen_flags: <defaults>
</compile_context>

<pallas_src>
import functools

import jax
import jax.numpy as jnp
from jax.experimental import pallas as pl
from jax.experimental.pallas import tpu as pltpu

_NEG = -1e30  # finite "minus infinity" for masked logits (keeps max/exp NaN-free)


def _attn_kernel(*refs, has_mask):
    if has_mask:
        q_ref, k_ref, v_ref, m_ref, o_ref, m_i, l_i, acc = refs
    else:
        q_ref, k_ref, v_ref, o_ref, m_i, l_i, acc = refs
        m_ref = None

    ki = pl.program_id(2)
    nk = pl.num_programs(2)

    @pl.when(ki == 0)
    def _():
        m_i[...] = jnp.full_like(m_i, _NEG)
        l_i[...] = jnp.zeros_like(l_i)
        acc[...] = jnp.zeros_like(acc)

    q = q_ref[0]                        # (H, tq, D)  native dtype
    k = k_ref[0]                        # (H, tk, D)
    v = v_ref[0]                        # (H, tk, Dv)

    # Scale q (H*tq*D elems) rather than the (H, tq, tk) score matrix.
    scale = jnp.asarray(q.shape[-1] ** -0.5, dtype=q.dtype)
    s = jnp.einsum("hqd,hkd->hqk", q * scale, k,
                   preferred_element_type=jnp.float32)      # (H, tq, tk) f32

    if has_mask:
        keep = m_ref[0] != 0            # (1 or H, tq, tk) bool; broadcasts over H
        s = jnp.where(keep, s, _NEG)

    m_prev = m_i[...]
    m_new = jnp.maximum(m_prev, jnp.max(s, axis=-1, keepdims=True))
    alpha = jnp.exp(m_prev - m_new)                          # EUP
    p = jnp.exp(s - m_new)                                   # EUP
    if has_mask:
        # Exactly zero weight for masked keys (also makes l == 0 flag
        # fully-masked rows, replacing the whole-tile nan_to_num).
        p = jnp.where(keep, p, 0.0)

    l_i[...] = alpha * l_i[...] + jnp.sum(p, axis=-1, keepdims=True)
    acc[...] = alpha * acc[...] + jnp.einsum(
        "hqk,hkd->hqd", p.astype(v.dtype), v,
        preferred_element_type=jnp.float32)
    m_i[...] = m_new

    @pl.when(ki == nk - 1)
    def _():
        l = l_i[...]                                   # (H, tq, 1)
        inv = pl.reciprocal(l, approx=True)            # EUP slot, ~free
        o = acc[...] * inv                             # (H, tq, Dv) f32
        if has_mask:
            o = jnp.where(l > 0.0, o, 0.0)             # fully-masked rows -> 0
        # Fold heads into lanes -> one lane-dense (tq, H*Dv) store
        # (pure lane concatenation; no sublane shuffles).
        o_ref[0] = jnp.concatenate(
            [o[h] for h in range(o.shape[0])], axis=-1).astype(o_ref.dtype)


def _pick_tile(n, candidates):
    for c in candidates:
        if n >= c and n % c == 0:
            return c
    return n


def attention(q, k, v, mask=None, *, tq=None, tk=None):
    """q, k: [B, H, Sq|Sk, D]; v: [B, H, Sk, Dv]; mask broadcastable to [B, H, Sq, Sk]."""
    B, H, Sq, D = q.shape
    Sk = k.shape[-2]
    Dv = v.shape[-1]

    # PyTorch forward edge case: empty sequences -> zeros.
    if Sq == 0 or Sk == 0:
        return jnp.zeros((*q.shape[:-1], Dv), dtype=q.dtype)

    if tq is None:
        tq = _pick_tile(Sq, (256, 128))
    if tk is None:
        tk = _pick_tile(Sk, (512, 256, 128))
    grid = (B, Sq // tq, Sk // tk)

    q_spec = pl.BlockSpec((1, H, tq, D), lambda b, qi, ki: (b, 0, qi, 0))
    k_spec = pl.BlockSpec((1, H, tk, D), lambda b, qi, ki: (b, 0, ki, 0))
    v_spec = pl.BlockSpec((1, H, tk, Dv), lambda b, qi, ki: (b, 0, ki, 0))
    o_spec = pl.BlockSpec((1, tq, H * Dv), lambda b, qi, ki: (b, qi, 0))

    in_specs = [q_spec, k_spec, v_spec]
    args = [q, k, v]
    has_mask = mask is not None
    if has_mask:
        m4 = jnp.asarray(mask)
        if m4.ndim < 4:
            m4 = m4.reshape((1,) * (4 - m4.ndim) + m4.shape)
        if m4.shape[-2:] != (Sq, Sk):
            # Uncommon query/key-broadcast masks: materialize (still int8).
            m4 = jnp.broadcast_to(m4, (B, H, Sq, Sk))
        m4 = m4.astype(jnp.int8)                 # 1 byte, not int32
        MB, MH = m4.shape[0], m4.shape[1]        # dedup across batch / heads
        m_spec = pl.BlockSpec(
            (1, MH, tq, tk),
            lambda b, qi, ki, _MB=MB: (b if _MB > 1 else 0, 0, qi, ki))
        in_specs.append(m_spec)
        args.append(m4)

    kernel = functools.partial(_attn_kernel, has_mask=has_mask)

    out = pl.pallas_call(
        kernel,
        out_shape=jax.ShapeDtypeStruct((B, Sq, H * Dv), q.dtype),
        grid_spec=pltpu.PrefetchScalarGridSpec(
            num_scalar_prefetch=0,
            grid=grid,
            in_specs=in_specs,
            out_specs=o_spec,
            scratch_shapes=[
                pltpu.VMEM((H, tq, 1), jnp.float32),    # running row max
                pltpu.VMEM((H, tq, 1), jnp.float32),    # running denominator
                pltpu.VMEM((H, tq, Dv), jnp.float32),   # running numerator
            ],
        ),
        compiler_params=pltpu.CompilerParams(
            dimension_semantics=("parallel", "parallel", "arbitrary"),
            # Headroom over the default scoped limit, below v7x's 64 MiB ceiling.
            vmem_limit_bytes=48 * 1024 * 1024,
        ),
    )(*args)

    # (B, Sq, H*Dv) -> (B, H, Sq, Dv): layout plumbing outside the kernel.
    return out.reshape(B, Sq, H, Dv).transpose(0, 2, 1, 3)


def attention_ref(q, k, v, mask=None):
    """Pure-JAX reference mirroring the PyTorch SDPA / manual path."""
    scale = q.shape[-1] ** -0.5
    sim = jnp.einsum("...id,...jd->...ij", q, k) * scale
    if mask is not None:
        sim = jnp.where(mask, sim, -jnp.inf)
    attn = jax.nn.softmax(sim, axis=-1)
    out = jnp.einsum("...ij,...jd->...id", attn, v)
    if mask is not None:
        out = jnp.nan_to_num(out)
    return out


if __name__ == "__main__":
    key = jax.random.PRNGKey(0)
    kq, kk, kv, km = jax.random.split(key, 4)

    B, H, S, D = 2, 4, 8, 32
    q = jax.random.normal(kq, (B, H, S, D), dtype=jnp.float32)
    k = jax.random.normal(kk, (B, H, S, D), dtype=jnp.float32)
    v = jax.random.normal(kv, (B, H, S, D), dtype=jnp.float32)

    # no-mask path
    out = attention(q, k, v)
    jax.block_until_ready(out)
    ref = attention_ref(q, k, v)
    assert out.shape == (B, H, S, D)
    assert jnp.allclose(out, ref, atol=5e-3, rtol=5e-3)

    # per-head mask, including a fully-masked row (must come out as zeros)
    mask = jax.random.bernoulli(km, p=0.8, shape=(B, H, S, S))
    mask = mask.at[:, :, 0, :].set(False)
    out_m = attention(q, k, v, mask)
    jax.block_until_ready(out_m)
    ref_m = attention_ref(q, k, v, mask)
    assert jnp.allclose(out_m, ref_m, atol=5e-3, rtol=5e-3)

    # shared (B, 1, Sq, Sk) mask: dedup'd across heads via the index_map
    mask_s = jax.random.bernoulli(km, p=0.7, shape=(B, 1, S, S))
    out_s = attention(q, k, v, mask_s)
    jax.block_until_ready(out_s)
    ref_s = attention_ref(q, k, v, mask_s)
    assert jnp.allclose(out_s, ref_s, atol=5e-3, rtol=5e-3)

    print("KERNEL_OK")
</pallas_src>

<mosaic_0001>
module attributes {stable_mosaic.version = 11 : i64} {
  func.func @_attn_kernel(%arg0: i32, %arg1: i32, %arg2: i32, %arg3: memref<1x4x8x32xf32, #tpu.memory_space<vmem>>, %arg4: memref<1x4x8x32xf32, #tpu.memory_space<vmem>>, %arg5: memref<1x4x8x32xf32, #tpu.memory_space<vmem>>, %arg6: memref<1x8x128xf32, #tpu.memory_space<vmem>>, %arg7: memref<4x8x1xf32, #tpu.memory_space<vmem>>, %arg8: memref<4x8x1xf32, #tpu.memory_space<vmem>>, %arg9: memref<4x8x32xf32, #tpu.memory_space<vmem>>) attributes {dimension_semantics = [#tpu.dimension_semantics<parallel>, #tpu.dimension_semantics<parallel>, #tpu.dimension_semantics<arbitrary>], iteration_bounds = array<i64: 2, 1, 1>, scalar_prefetch = 0 : i64, scratch_operands = 3 : i64, tpu.core_type = #tpu.core_type<tc>, window_params = [{transform_indices = @transform_0, window_bounds = array<i64: 1, 4, 8, 32>}, {transform_indices = @transform_1, window_bounds = array<i64: 1, 4, 8, 32>}, {transform_indices = @transform_2, window_bounds = array<i64: 1, 4, 8, 32>}, {transform_indices = @transform_3, window_bounds = array<i64: 1, 8, 128>}]} {
    %c0_i32 = arith.constant 0 : i32
    %0 = arith.cmpi eq, %arg2, %c0_i32 : i32
    %1 = arith.extui %0 : i1 to i32
    %c0_i32_0 = arith.constant 0 : i32
    %2 = arith.cmpi ne, %1, %c0_i32_0 : i32
    scf.if %2 {
      %cst_36 = arith.constant -1.000000e+30 : f32
      %37 = vector.broadcast %cst_36 : f32 to vector<4x8x1xf32>
      %c0_37 = arith.constant 0 : index
      %c0_38 = arith.constant 0 : index
      %c0_39 = arith.constant 0 : index
      %38 = vector.load %arg7[%c0_37, %c0_38, %c0_39] : memref<4x8x1xf32, #tpu.memory_space<vmem>>, vector<4x8x1xf32>
      tpu.vector_store %arg7[%c0_37, %c0_38, %c0_39], %37 {strides = array<i32>} : memref<4x8x1xf32, #tpu.memory_space<vmem>>, vector<4x8x1xf32>,
      %cst_40 = arith.constant 0.000000e+00 : f32
      %39 = vector.broadcast %cst_40 : f32 to vector<4x8x1xf32>
      %c0_41 = arith.constant 0 : index
      %c0_42 = arith.constant 0 : index
      %c0_43 = arith.constant 0 : index
      %40 = vector.load %arg8[%c0_41, %c0_42, %c0_43] : memref<4x8x1xf32, #tpu.memory_space<vmem>>, vector<4x8x1xf32>
      tpu.vector_store %arg8[%c0_41, %c0_42, %c0_43], %39 {strides = array<i32>} : memref<4x8x1xf32, #tpu.memory_space<vmem>>, vector<4x8x1xf32>,
      %cst_44 = arith.constant 0.000000e+00 : f32
      %41 = vector.broadcast %cst_44 : f32 to vector<4x8x32xf32>
      %c0_45 = arith.constant 0 : index
      %c0_46 = arith.constant 0 : index
      %c0_47 = arith.constant 0 : index
      %42 = vector.load %arg9[%c0_45, %c0_46, %c0_47] : memref<4x8x32xf32, #tpu.memory_space<vmem>>, vector<4x8x32xf32>
      tpu.vector_store %arg9[%c0_45, %c0_46, %c0_47], %41 {strides = array<i32>} : memref<4x8x32xf32, #tpu.memory_space<vmem>>, vector<4x8x32xf32>,
    } else {
    }
    %c0 = arith.constant 0 : index
    %c0_1 = arith.constant 0 : index
    %c0_2 = arith.constant 0 : index
    %c0_3 = arith.constant 0 : index
    %3 = vector.load %arg3[%c0, %c0_1, %c0_2, %c0_3] : memref<1x4x8x32xf32, #tpu.memory_space<vmem>>, vector<1x4x8x32xf32>
    %4 = vector.shape_cast %3 : vector<1x4x8x32xf32> to vector<4x8x32xf32>
    %c0_4 = arith.constant 0 : index
    %c0_5 = arith.constant 0 : index
    %c0_6 = arith.constant 0 : index
    %c0_7 = arith.constant 0 : index
    %5 = vector.load %arg4[%c0_4, %c0_5, %c0_6, %c0_7] : memref<1x4x8x32xf32, #tpu.memory_space<vmem>>, vector<1x4x8x32xf32>
    %6 = vector.shape_cast %5 : vector<1x4x8x32xf32> to vector<4x8x32xf32>
    %c0_8 = arith.constant 0 : index
    %c0_9 = arith.constant 0 : index
    %c0_10 = arith.constant 0 : index
    %c0_11 = arith.constant 0 : index
    %7 = vector.load %arg5[%c0_8, %c0_9, %c0_10, %c0_11] : memref<1x4x8x32xf32, #tpu.memory_space<vmem>>, vector<1x4x8x32xf32>
    %8 = vector.shape_cast %7 : vector<1x4x8x32xf32> to vector<4x8x32xf32>
    %cst = arith.constant 0.176776692 : f32
    %9 = vector.broadcast %cst : f32 to vector<4x8x32xf32>
    %10 = arith.mulf %4, %9 : vector<4x8x32xf32>
    "tpu.trace_start"() <{level = 10 : i32, message = "hqd,hkd->hqk"}> : () -> ()
    %cst_12 = arith.constant dense<0.000000e+00> : vector<4x8x8xf32>
    %11 = tpu.matmul %10, %6, %cst_12 {dimension_numbers = #tpu.dot_dimension_numbers<[2], [2], [1], [1], [0, 0, 0, 1, 1, 1], [0], [0]>} : vector<4x8x32xf32>, vector<4x8x32xf32>, vector<4x8x8xf32> -> vector<4x8x8xf32>
    "tpu.trace_stop"() : () -> ()
    %c0_13 = arith.constant 0 : index
    %c0_14 = arith.constant 0 : index
    %c0_15 = arith.constant 0 : index
    %12 = vector.load %arg7[%c0_13, %c0_14, %c0_15] : memref<4x8x1xf32, #tpu.memory_space<vmem>>, vector<4x8x1xf32>
    %cst_16 = arith.constant dense<0xFF800000> : vector<4x8xf32>
    %13 = vector.multi_reduction <maximumf>, %11, %cst_16 [2] : vector<4x8x8xf32> to vector<4x8xf32>
    %14 = vector.shape_cast %13 : vector<4x8xf32> to vector<4x8x1xf32>
    %15 = arith.maximumf %12, %14 : vector<4x8x1xf32>
    %16 = arith.subf %12, %15 : vector<4x8x1xf32>
    %17 = math.exp %16 : vector<4x8x1xf32>
    %18 = vector.broadcast %15 : vector<4x8x1xf32> to vector<4x8x8xf32>
    %19 = arith.subf %11, %18 : vector<4x8x8xf32>
    %20 = math.exp %19 : vector<4x8x8xf32>
    %c0_17 = arith.constant 0 : index
    %c0_18 = arith.constant 0 : index
    %c0_19 = arith.constant 0 : index
    %21 = vector.load %arg8[%c0_17, %c0_18, %c0_19] : memref<4x8x1xf32, #tpu.memory_space<vmem>>, vector<4x8x1xf32>
    %22 = arith.mulf %17, %21 : vector<4x8x1xf32>
    %cst_20 = arith.constant dense<0.000000e+00> : vector<4x8xf32>
    %23 = vector.multi_reduction <add>, %20, %cst_20 [2] : vector<4x8x8xf32> to vector<4x8xf32>
    %24 = vector.shape_cast %23 : vector<4x8xf32> to vector<4x8x1xf32>
    %25 = arith.addf %22, %24 : vector<4x8x1xf32>
    %c0_21 = arith.constant 0 : index
    %c0_22 = arith.constant 0 : index
    %c0_23 = arith.constant 0 : index
    %26 = vector.load %arg8[%c0_21, %c0_22, %c0_23] : memref<4x8x1xf32, #tpu.memory_space<vmem>>, vector<4x8x1xf32>
    tpu.vector_store %arg8[%c0_21, %c0_22, %c0_23], %25 {strides = array<i32>} : memref<4x8x1xf32, #tpu.memory_space<vmem>>, vector<4x8x1xf32>,
    %c0_24 = arith.constant 0 : index
    %c0_25 = arith.constant 0 : index
    %c0_26 = arith.constant 0 : index
    %27 = vector.load %arg9[%c0_24, %c0_25, %c0_26] : memref<4x8x32xf32, #tpu.memory_space<vmem>>, vector<4x8x32xf32>
    %28 = vector.broadcast %17 : vector<4x8x1xf32> to vector<4x8x32xf32>
    %29 = arith.mulf %28, %27 : vector<4x8x32xf32>
    "tpu.trace_start"() <{level = 10 : i32, message = "hqk,hkd->hqd"}> : () -> ()
    %cst_27 = arith.constant dense<0.000000e+00> : vector<4x8x32xf32>
    %30 = tpu.matmul %20, %8, %cst_27 {dimension_numbers = #tpu.dot_dimension_numbers<[2], [1], [1], [2], [0, 0, 0, 1, 1, 2], [0], [0]>} : vector<4x8x8xf32>, vector<4x8x32xf32>, vector<4x8x32xf32> -> vector<4x8x32xf32>
    "tpu.trace_stop"() : () -> ()
    %31 = arith.addf %29, %30 : vector<4x8x32xf32>
    %c0_28 = arith.constant 0 : index
    %c0_29 = arith.constant 0 : index
    %c0_30 = arith.constant 0 : index
    %32 = vector.load %arg9[%c0_28, %c0_29, %c0_30] : memref<4x8x32xf32, #tpu.memory_space<vmem>>, vector<4x8x32xf32>
    tpu.vector_store %arg9[%c0_28, %c0_29, %c0_30], %31 {strides = array<i32>} : memref<4x8x32xf32, #tpu.memory_space<vmem>>, vector<4x8x32xf32>,
    %c0_31 = arith.constant 0 : index
    %c0_32 = arith.constant 0 : index
    %c0_33 = arith.constant 0 : index
    %33 = vector.load %arg7[%c0_31, %c0_32, %c0_33] : memref<4x8x1xf32, #tpu.memory_space<vmem>>, vector<4x8x1xf32>
    tpu.vector_store %arg7[%c0_31, %c0_32, %c0_33], %15 {strides = array<i32>} : memref<4x8x1xf32, #tpu.memory_space<vmem>>, vector<4x8x1xf32>,
    %c0_i32_34 = arith.constant 0 : i32
    %34 = arith.cmpi eq, %arg2, %c0_i32_34 : i32
    %35 = arith.extui %34 : i1 to i32
    %c0_i32_35 = arith.constant 0 : i32
    %36 = arith.cmpi ne, %35, %c0_i32_35 : i32
    scf.if %36 {
      %c0_36 = arith.constant 0 : index
      %c0_37 = arith.constant 0 : index
      %c0_38 = arith.constant 0 : index
      %37 = vector.load %arg8[%c0_36, %c0_37, %c0_38] : memref<4x8x1xf32, #tpu.memory_space<vmem>>, vector<4x8x1xf32>
      %38 = tpu.reciprocal %37 {approx = true} : vector<4x8x1xf32> -> vector<4x8x1xf32>
      %c0_39 = arith.constant 0 : index
      %c0_40 = arith.constant 0 : index
      %c0_41 = arith.constant 0 : index
      %39 = vector.load %arg9[%c0_39, %c0_40, %c0_41] : memref<4x8x32xf32, #tpu.memory_space<vmem>>, vector<4x8x32xf32>
      %40 = vector.broadcast %38 : vector<4x8x1xf32> to vector<4x8x32xf32>
      %41 = arith.mulf %39, %40 : vector<4x8x32xf32>
      %42 = vector.extract_strided_slice %41 {offsets = [0, 0, 0], sizes = [1, 8, 32], strides = [1, 1, 1]} : vector<4x8x32xf32> to vector<1x8x32xf32>
      %43 = vector.shape_cast %42 : vector<1x8x32xf32> to vector<8x32xf32>
      %44 = vector.extract_strided_slice %41 {offsets = [1, 0, 0], sizes = [1, 8, 32], strides = [1, 1, 1]} : vector<4x8x32xf32> to vector<1x8x32xf32>
      %45 = vector.shape_cast %44 : vector<1x8x32xf32> to vector<8x32xf32>
      %46 = vector.extract_strided_slice %41 {offsets = [2, 0, 0], sizes = [1, 8, 32], strides = [1, 1, 1]} : vector<4x8x32xf32> to vector<1x8x32xf32>
      %47 = vector.shape_cast %46 : vector<1x8x32xf32> to vector<8x32xf32>
      %48 = vector.extract_strided_slice %41 {offsets = [3, 0, 0], sizes = [1, 8, 32], strides = [1, 1, 1]} : vector<4x8x32xf32> to vector<1x8x32xf32>
      %49 = vector.shape_cast %48 : vector<1x8x32xf32> to vector<8x32xf32>
      %50 = tpu.concatenate %43, %45, %47, %49 in 1 : vector<8x32xf32>, vector<8x32xf32>, vector<8x32xf32>, vector<8x32xf32> -> vector<8x128xf32>
      %c0_42 = arith.constant 0 : index
      %c0_43 = arith.constant 0 : index
      %c0_44 = arith.constant 0 : index
      %51 = vector.load %arg6[%c0_42, %c0_43, %c0_44] : memref<1x8x128xf32, #tpu.memory_space<vmem>>, vector<1x8x128xf32>
      %52 = vector.shape_cast %51 : vector<1x8x128xf32> to vector<8x128xf32>
      %53 = vector.shape_cast %50 : vector<8x128xf32> to vector<1x8x128xf32>
      tpu.vector_store %arg6[%c0_42, %c0_43, %c0_44], %53 {strides = array<i32>} : memref<1x8x128xf32, #tpu.memory_space<vmem>>, vector<1x8x128xf32>,
    } else {
    }
    return
  }
  func.func @transform_0(%arg0: i32, %arg1: i32, %arg2: i32) -> (i32, i32, i32, i32) {
    %c0_i32 = arith.constant 0 : i32
    %c0_i32_0 = arith.constant 0 : i32
    %c0_i32_1 = arith.constant 0 : i32
    return %arg0, %c0_i32, %arg1, %c0_i32_0 : i32, i32, i32, i32
  }
  func.func @transform_1(%arg0: i32, %arg1: i32, %arg2: i32) -> (i32, i32, i32, i32) {
    %c0_i32 = arith.constant 0 : i32
    %c0_i32_0 = arith.constant 0 : i32
    %c0_i32_1 = arith.constant 0 : i32
    return %arg0, %c0_i32, %arg2, %c0_i32_0 : i32, i32, i32, i32
  }
  func.func @transform_2(%arg0: i32, %arg1: i32, %arg2: i32) -> (i32, i32, i32, i32) {
    %c0_i32 = arith.constant 0 : i32
    %c0_i32_0 = arith.constant 0 : i32
    %c0_i32_1 = arith.constant 0 : i32
    return %arg0, %c0_i32, %arg2, %c0_i32_0 : i32, i32, i32, i32
  }
  func.func @transform_3(%arg0: i32, %arg1: i32, %arg2: i32) -> (i32, i32, i32) {
    %c0_i32 = arith.constant 0 : i32
    %c0_i32_0 = arith.constant 0 : i32
    return %arg0, %arg1, %c0_i32 : i32, i32, i32
  }
}

</mosaic_0001>

<llo_original>
// kernel: tpu_custom_call.1
$region0: #{tpu_custom_call.1}
  #allocation0 [shape = 'u32[]', space=smem, size = 0x4, offset = 0x4, fixed_abs, tag = 'smem constant byte address 0x4 - core index']
  #allocation1 [shape = 'u32[144,128]{1,0:T(1,128)}', space=vmem, size = 0x12000, scoped, tag = 'internal scratch']
  #allocation2 [shape = 'f32[4,8,1]{2,1,0:T(8,128)}', space=vmem, size = 0x4000, scoped, tag = 'scratch operand']
  #allocation3 [shape = 'f32[4,8,1]{2,1,0:T(8,128)}', space=vmem, size = 0x4000, scoped, tag = 'scratch operand']
  #allocation4 [shape = 'f32[4,8,32]{2,1,0:T(8,128)}', space=vmem, size = 0x4000, scoped, tag = 'scratch operand']
  %s0 = inlined_call_operand.hbm [shape: f32[2,4,8,32], index: 0, kind: input, shape index: {}]
  %s1 = inlined_call_operand.hbm [shape: f32[2,4,8,32], index: 1, kind: input, shape index: {}]
  %s2 = inlined_call_operand.hbm [shape: f32[2,4,8,32], index: 2, kind: input, shape index: {}]
  %s3 = inlined_call_operand.hbm [shape: f32[2,8,128], index: 3, kind: output, shape index: {}]
  %s4 = sld [smem:[#allocation0]]
  $region65: #{tpu_custom_call.1} parent=0
    _
  %s6 = ssub.s32 1, %s4
  %s7 = scalar_select 0, %s6, %s4
  $region1: #{tpu_custom_call.1} parent=0
    #allocation5 [shape = 'u8[32768]{0}', space=vmem, size = 0x8000, scoped, tag = 'input window, operand 0']
    #allocation6 [shape = 's32[2]{0}', space=sflag, size = 0x8, scoped, tag = 'scoped memory for tpu_custom_call.1']
    #allocation7 [shape = 's32[2]{0}', space=sflag, size = 0x8, scoped, tag = 'scoped memory for tpu_custom_call.1']
    #allocation8 [shape = 'u8[32768]{0}', space=vmem, size = 0x8000, scoped, tag = 'input window, operand 1']
    #allocation9 [shape = 's32[2]{0}', space=sflag, size = 0x8, scoped, tag = 'scoped memory for tpu_custom_call.1']
    #allocation10 [shape = 'u8[32768]{0}', space=vmem, size = 0x8000, scoped, tag = 'input window, operand 2']
    #allocation11 [shape = 'u8[8192]{0}', space=vmem, size = 0x2000, scoped, tag = 'output window, operand 0']
    %8 = vsyncpa [#allocation6], 0
    %s9 = scalar_lea.sflag [#allocation6], 1
    %10 = vsyncpa %s9, 0
    %11 = vsyncpa [#allocation9], 0
    %s12 = scalar_lea.sflag [#allocation9], 1
    %13 = vsyncpa %s12, 0
    %14 = vsyncpa [#allocation7], 0
    %s15 = scalar_lea.sflag [#allocation7], 1
    %16 = vsyncpa %s15, 0
    loop: start=0, step=1, limit=4
    $region2: #{tpu_custom_call.1} parent=1 // loop_pre_header
      _
    $region3: #{tpu_custom_call.1} parent=1 // loop_header
      %s18 = sphi 0, %s22
      %p19 = scmp.ge.s32.totalorder %s18, 4
      %s25 = sphi 0, %s44
      %s26 = sphi 0, %s40
      %s27 = sphi 0, %s36
      %s28 = sphi 0, %s25
      %s29 = sphi 0, %s26
      %s30 = sphi 0, %s27
      %s31 = sphi 0, %s28
      %s32 = sphi 0, %s29
      %s33 = sphi 0, %s30
      %s49 = sphi 0, %s51
      %s52 = sphi 0, %s49
      %s53 = sphi 0, %s52
      %s69 = sphi 0, %s53
      %s77 = sphi 0, %s79
      %s80 = sphi 0, %s77
      %s81 = sphi 0, %s80
      %s97 = sphi 0, %s81
      %s105 = sphi 0, %s107
      %s108 = sphi 0, %s105
      %s109 = sphi 0, %s108
      %s125 = sphi 0, %s109
      %s133 = sphi 0, %s135
      %s136 = sphi 0, %s133
      %s137 = sphi 0, %s136
      %s153 = sphi 0, %s137
    $region4: #{tpu_custom_call.1} parent=1 // loop_header_branch
      %21 = sbr.rel (%p19) target = $region8
    $region5: #{tpu_custom_call.1} parent=1 // loop_body
      %s23 = ssub.s32 %s18, 1
      %s24 = ssub.s32 %s18, 2
      %s34 = sadd.s32 1, %s27
      %p35 = scmp.ge.s32.totalorder %s34, 1
      %s36 = scalar_select %p35, 0, %s34
      %s37 = sadd.s32 1, %s26
      %s38 = scalar_select %p35, %s37, %s26
      %p39 = scmp.ge.s32.totalorder %s38, 1
      %s40 = scalar_select %p39, 0, %s38
      %s41 = sadd.s32 1, %s25
      %s42 = scalar_select %p39, %s41, %s25
      %p43 = scmp.ge.s32.totalorder %s42, 2
      %s44 = scalar_select %p43, 0, %s42
      %s45 = ssub.s32 %s25, %s44
      %s46 = ssub.s32 %s26, %s40
      %s47 = sor.u32 %s45, %s46
      %p48 = scmp.eq.s32.totalorder %s47, 0
      %s50 = sadd.s32 %s49, 1
      %s51 = scalar_select %p48, %s49, %s50
      %p54 = pneg %p48
      %p55 = scmp.eq.s32.totalorder %s18, 1
      %p56 = por %p54, %p55
      %p57 = scmp.ne.s32.totalorder %s49, %s52
      %p58 = scmp.eq.s32.totalorder %s18, 0
      %p59 = por %p57, %p58
      %p60 = scmp.ne.s32.totalorder %s49, %s52
      %p61 = scmp.eq.s32.totalorder %s23, 1
      %p62 = por %p60, %p61
      %p63 = scmp.ne.s32.totalorder %s52, %s53
      %p64 = scmp.eq.s32.totalorder %s23, 0
      %p65 = por %p63, %p64
      %p66 = scmp.ne.s32.totalorder %s52, %s53
      %p67 = scmp.eq.s32.totalorder %s24, 1
      %p68 = por %p66, %p67
      %p70 = scmp.ne.s32.totalorder %s53, %s69
      %p71 = scmp.eq.s32.totalorder %s24, 0
      %p72 = por %p70, %p71
      %s73 = ssub.s32 %s25, %s44
      %s74 = ssub.s32 %s27, %s36
      %s75 = sor.u32 %s73, %s74
      %p76 = scmp.eq.s32.totalorder %s75, 0
      %s78 = sadd.s32 %s77, 1
      %s79 = scalar_select %p76, %s77, %s78
      %p82 = pneg %p76
      %p83 = scmp.eq.s32.totalorder %s18, 1
      %p84 = por %p82, %p83
      %p85 = scmp.ne.s32.totalorder %s77, %s80
      %p86 = scmp.eq.s32.totalorder %s18, 0
      %p87 = por %p85, %p86
      %p88 = scmp.ne.s32.totalorder %s77, %s80
      %p89 = scmp.eq.s32.totalorder %s23, 1
      %p90 = por %p88, %p89
      %p91 = scmp.ne.s32.totalorder %s80, %s81
      %p92 = scmp.eq.s32.totalorder %s23, 0
      %p93 = por %p91, %p92
      %p94 = scmp.ne.s32.totalorder %s80, %s81
      %p95 = scmp.eq.s32.totalorder %s24, 1
      %p96 = por %p94, %p95
      %p98 = scmp.ne.s32.totalorder %s81, %s97
      %p99 = scmp.eq.s32.totalorder %s24, 0
      %p100 = por %p98, %p99
      %s101 = ssub.s32 %s25, %s44
      %s102 = ssub.s32 %s27, %s36
      %s103 = sor.u32 %s101, %s102
      %p104 = scmp.eq.s32.totalorder %s103, 0
      %s106 = sadd.s32 %s105, 1
      %s107 = scalar_select %p104, %s105, %s106
      %p110 = pneg %p104
      %p111 = scmp.eq.s32.totalorder %s18, 1
      %p112 = por %p110, %p111
      %p113 = scmp.ne.s32.totalorder %s105, %s108
      %p114 = scmp.eq.s32.totalorder %s18, 0
      %p115 = por %p113, %p114
      %p116 = scmp.ne.s32.totalorder %s105, %s108
      %p117 = scmp.eq.s32.totalorder %s23, 1
      %p118 = por %p116, %p117
      %p119 = scmp.ne.s32.totalorder %s108, %s109
      %p120 = scmp.eq.s32.totalorder %s23, 0
      %p121 = por %p119, %p120
      %p122 = scmp.ne.s32.totalorder %s108, %s109
      %p123 = scmp.eq.s32.totalorder %s24, 1
      %p124 = por %p122, %p123
      %p126 = scmp.ne.s32.totalorder %s109, %s125
      %p127 = scmp.eq.s32.totalorder %s24, 0
      %p128 = por %p126, %p127
      %s129 = ssub.s32 %s25, %s44
      %s130 = ssub.s32 %s26, %s40
      %s131 = sor.u32 %s129, %s130
      %p132 = scmp.eq.s32.totalorder %s131, 0
      %s134 = sadd.s32 %s133, 1
      %s135 = scalar_select %p132, %s133, %s134
      %p138 = pneg %p132
      %p139 = scmp.eq.s32.totalorder %s18, 1
      %p140 = por %p138, %p139
      %p141 = scmp.ne.s32.totalorder %s133, %s136
      %p142 = scmp.eq.s32.totalorder %s18, 0
      %p143 = por %p141, %p142
      %p144 = scmp.ne.s32.totalorder %s133, %s136
      %p145 = scmp.eq.s32.totalorder %s23, 1
      %p146 = por %p144, %p145
      %p147 = scmp.ne.s32.totalorder %s136, %s137
      %p148 = scmp.eq.s32.totalorder %s23, 0
      %p149 = por %p147, %p148
      %p150 = scmp.ne.s32.totalorder %s136, %s137
      %p151 = scmp.eq.s32.totalorder %s24, 1
      %p152 = por %p150, %p151
      %p154 = scmp.ne.s32.totalorder %s137, %s153
      %p155 = scmp.eq.s32.totalorder %s24, 0
      %p156 = por %p154, %p155
      %p157 = scmp.le.s32.totalorder 1, %s18
      %p158 = scmp.lt.s32.totalorder %s18, 3
      %p159 = pnand %p157, %p158
      %p160 = pneg %p159
      // Predicated region
      $region9: #{tpu_custom_call.1} parent=5 // pred_check
        _
      $region10: #{tpu_custom_call.1} parent=5 // pred_check_branch
        %162 = sbr.rel (%p159) target = $region12
      $region11: #{tpu_custom_call.1} parent=5 // pred_region
        %s163 = ssub.s32 %s18, 1
      $region12: #{tpu_custom_call.1} parent=5 // pred_fallthru
        _
      %p164 = scmp.lt.s32.totalorder %s18, 2
      // Predicated region
      $region13: #{tpu_custom_call.1} parent=5 // pred_check
        %p165 = pneg %p164
      $region14: #{tpu_custom_call.1} parent=5 // pred_check_branch
        %167 = sbr.rel (%p165) target = $region16
      $region15: #{tpu_custom_call.1} parent=5 // pred_region
        // Predicated region
        $region17: #{tpu_custom_call.1} parent=15 // pred_check
          %p168 = pneg %p59
        $region18: #{tpu_custom_call.1} parent=15 // pred_check_branch
          %170 = sbr.rel (%p168) target = $region20
        $region19: #{tpu_custom_call.1} parent=15 // pred_region
          %s171 = sand.u32 %s49, 1
          %s172 = scalar_lea.sflag [#allocation6], %s171
          %s173 = sand.u32 %s49, 1
          %s174 = smul.addr %s173, 32
          %s175 = scalar_lea.vmem [#allocation5], %s174
          %s177 = ssub.s32 512, 512
          %178 = vsyncadd %s172, %s177
          %s179 = smul.addr %s25, 4
          %s180 = sadd.s32 %s26, %s179
          %s181 = smul.addr %s180, 128
          %s182 = scalar_lea.hbm %s0, %s181
          %s183 = sshll.u32 %s175, 4
          %s184 = int_to_ptr.vmem [resolvable:$true] %s183
          %189 = dma.hbm_to_vmem [thread:$0]  %s182, 512, %s184, %s172, 128, 128, 8
        $region20: #{tpu_custom_call.1} parent=15 // pred_fallthru
          _
        // Predicated region
        $region21: #{tpu_custom_call.1} parent=15 // pred_check
          %p190 = pneg %p87
        $region22: #{tpu_custom_call.1} parent=15 // pred_check_branch
          %192 = sbr.rel (%p190) target = $region24
        $region23: #{tpu_custom_call.1} parent=15 // pred_region
          %s193 = sand.u32 %s18, 1
          %s194 = scalar_lea.sflag [#allocation9], %s193
          %s195 = sand.u32 %s77, 1
          %s196 = smul.addr %s195, 32
          %s197 = scalar_lea.vmem [#allocation8], %s196
          %s199 = ssub.s32 512, 512
          %200 = vsyncadd %s194, %s199
          %s201 = smul.addr %s25, 4
          %s202 = sadd.s32 %s27, %s201
          %s203 = smul.addr %s202, 128
          %s204 = scalar_lea.hbm %s1, %s203
          %s205 = sshll.u32 %s197, 4
          %s206 = int_to_ptr.vmem [resolvable:$true] %s205
          %211 = dma.hbm_to_vmem [thread:$0]  %s204, 512, %s206, %s194, 128, 128, 8
        $region24: #{tpu_custom_call.1} parent=15 // pred_fallthru
          _
        // Predicated region
        $region25: #{tpu_custom_call.1} parent=15 // pred_check
          %p212 = pneg %p115
        $region26: #{tpu_custom_call.1} parent=15 // pred_check_branch
          %214 = sbr.rel (%p212) target = $region28
        $region27: #{tpu_custom_call.1} parent=15 // pred_region
          %s215 = sand.u32 %s18, 1
          %s216 = scalar_lea.sflag [#allocation9], %s215
          %s217 = sand.u32 %s105, 1
          %s218 = smul.addr %s217, 32
          %s219 = scalar_lea.vmem [#allocation10], %s218
          %s221 = ssub.s32 512, 512
          %222 = vsyncadd %s216, %s221
          %s223 = smul.addr %s25, 4
          %s224 = sadd.s32 %s27, %s223
          %s225 = smul.addr %s224, 128
          %s226 = scalar_lea.hbm %s2, %s225
          %s227 = sshll.u32 %s219, 4
          %s228 = int_to_ptr.vmem [resolvable:$true] %s227
          %233 = dma.hbm_to_vmem [thread:$0]  %s226, 512, %s228, %s216, 128, 128, 8
        $region28: #{tpu_custom_call.1} parent=15 // pred_fallthru
          _
      $region16: #{tpu_custom_call.1} parent=5 // pred_fallthru
        _
      %p234 = scmp.le.s32.totalorder 1, %s18
      %p235 = scmp.lt.s32.totalorder %s18, 3
      %p236 = pnand %p234, %p235
      %p237 = pneg %p236
      // Predicated region
      $region29: #{tpu_custom_call.1} parent=5 // pred_check
        _
      $region30: #{tpu_custom_call.1} parent=5 // pred_check_branch
        %239 = sbr.rel (%p236) target = $region32
      $region31: #{tpu_custom_call.1} parent=5 // pred_region
        %s240 = ssub.s32 %s18, 1
        %s241 = sand.u32 %s52, 1
        %s242 = scalar_lea.sflag [#allocation6], %s241
        %s243 = sand.u32 %s52, 1
        %s244 = smul.addr %s243, 32
        %s245 = scalar_lea.vmem [#allocation5], %s244
        // Predicated region
        $region33: #{tpu_custom_call.1} parent=31 // pred_check
          %p246 = pneg %p65
        $region34: #{tpu_custom_call.1} parent=31 // pred_check_branch
          %248 = sbr.rel (%p246) target = $region36
        $region35: #{tpu_custom_call.1} parent=31 // pred_region
          %249 = dma.done %s242, 512
        $region36: #{tpu_custom_call.1} parent=31 // pred_fallthru
          _
        %s250 = sand.u32 %s23, 1
        %s251 = scalar_lea.sflag [#allocation9], %s250
        %s252 = sand.u32 %s80, 1
        %s253 = smul.addr %s252, 32
        %s254 = scalar_lea.vmem [#allocation8], %s253
        // Predicated region
        $region37: #{tpu_custom_call.1} parent=31 // pred_check
          %p255 = pneg %p93
        $region38: #{tpu_custom_call.1} parent=31 // pred_check_branch
          %257 = sbr.rel (%p255) target = $region40
        $region39: #{tpu_custom_call.1} parent=31 // pred_region
          %258 = dma.done %s251, 512
        $region40: #{tpu_custom_call.1} parent=31 // pred_fallthru
          _
        %s259 = sand.u32 %s23, 1
        %s260 = scalar_lea.sflag [#allocation9], %s259
        %s261 = sand.u32 %s108, 1
        %s262 = smul.addr %s261, 32
        %s263 = scalar_lea.vmem [#allocation10], %s262
        // Predicated region
        $region41: #{tpu_custom_call.1} parent=31 // pred_check
          %p264 = pneg %p121
        $region42: #{tpu_custom_call.1} parent=31 // pred_check_branch
          %266 = sbr.rel (%p264) target = $region44
        $region43: #{tpu_custom_call.1} parent=31 // pred_region
          %267 = dma.done %s260, 512
        $region44: #{tpu_custom_call.1} parent=31 // pred_fallthru
          _
        %s268 = sand.u32 %s52, 1
        %s269 = scalar_lea.sflag [#allocation6], %s268
        %s270 = sand.u32 %s52, 1
        %s271 = smul.addr %s270, 32
        %s272 = scalar_lea.vmem [#allocation5], %s271
        %p273 = pneg %p65
        %p274 = pneg %p62
        %s275 = sand.u32 %s23, 1
        %s276 = scalar_lea.sflag [#allocation9], %s275
        %s277 = sand.u32 %s80, 1
        %s278 = smul.addr %s277, 32
        %s279 = scalar_lea.vmem [#allocation8], %s278
        %p280 = pneg %p93
        %p281 = pneg %p90
        %s282 = sand.u32 %s23, 1
        %s283 = scalar_lea.sflag [#allocation9], %s282
        %s284 = sand.u32 %s108, 1
        %s285 = smul.addr %s284, 32
        %s286 = scalar_lea.vmem [#allocation10], %s285
        %p287 = pneg %p121
        %p288 = pneg %p118
        %p289 = pneg %p149
        %p290 = pneg %p146
        %s291 = sand.u32 %s136, 1
        %s292 = scalar_lea.sflag [#allocation7], %s291
        %s293 = sand.u32 %s136, 1
        %s294 = smul.addr %s293, 8
        %s295 = scalar_lea.vmem [#allocation11], %s294
        %p296 = scmp.eq.s32.totalorder %s30, 0
        // Predicated region
        $region45: #{tpu_custom_call.1} parent=31 // pred_check
          %p297 = pneg %p296
        $region46: #{tpu_custom_call.1} parent=31 // pred_check_branch
          %299 = sbr.rel (%p297) target = $region48
        $region47: #{tpu_custom_call.1} parent=31 // pred_region
          %vm300 = vcmask 7168
          %301 = vst.msk [vmem:[#allocation2] sm:$0xff] %vm300, -1e+30
          %302 = vst.msk [vmem:[#allocation2 + $0x8] sm:$0xff] %vm300, -1e+30
          %303 = vst.msk [vmem:[#allocation2 + $0x10] sm:$0xff] %vm300, -1e+30
          %304 = vst.msk [vmem:[#allocation2 + $0x18] sm:$0xff] %vm300, -1e+30
          %305 = vst.msk [vmem:[#allocation3] sm:$0xff] %vm300, 0.0
          %306 = vst.msk [vmem:[#allocation3 + $0x8] sm:$0xff] %vm300, 0.0
          %307 = vst.msk [vmem:[#allocation3 + $0x10] sm:$0xff] %vm300, 0.0
          %308 = vst.msk [vmem:[#allocation3 + $0x18] sm:$0xff] %vm300, 0.0
          %vm309 = vcmask 261120
          %310 = vst.msk [vmem:[#allocation4] sm:$0xff] %vm309, 0.0
          %311 = vst.msk [vmem:[#allocation4 + $0x8] sm:$0xff] %vm309, 0.0
          %312 = vst.msk [vmem:[#allocation4 + $0x10] sm:$0xff] %vm309, 0.0
          %313 = vst.msk [vmem:[#allocation4 + $0x18] sm:$0xff] %vm309, 0.0
        $region48: #{tpu_custom_call.1} parent=31 // pred_fallthru
          _
        %v314 = vld [vmem:[%s245] sm:$0xff]
        %v315 = vld [vmem:[%s245 + $0x8] sm:$0xff]
        %v316 = vld [vmem:[%s245 + $0x10] sm:$0xff]
        %v317 = vld [vmem:[%s245 + $0x18] sm:$0xff]
        %v318 = vld [vmem:[%s254] sm:$0xff]
        %v319 = vld [vmem:[%s254 + $0x8] sm:$0xff]
        %v320 = vld [vmem:[%s254 + $0x10] sm:$0xff]
        %v321 = vld [vmem:[%s254 + $0x18] sm:$0xff]
        %v322 = vld [vmem:[%s263] sm:$0xff]
        %v323 = vld [vmem:[%s263 + $0x8] sm:$0xff]
        %v324 = vld [vmem:[%s263 + $0x10] sm:$0xff]
        %v325 = vld [vmem:[%s263 + $0x18] sm:$0xff]
        %v326 = vmul.f32 %v314, 0.17677669
        %v327 = vmul.f32 %v315, 0.17677669
        %v328 = vmul.f32 %v316, 0.17677669
        %v329 = vmul.f32 %v317, 0.17677669
        %vm330 = vcmask 261120
        %v332 = vsel %vm330, %v326, 0
        %v335 = vsel %vm330, %v318, 0
        %337 = vmatprep.subr.mxu0 0.0
        %338 = vmatpush1.xpose.msra.mxu0 %v335
        %339 = vmatprep.subr.mxu0 0.0
        %340 = vmatpush1.xpose.msra.mxu0 0.0
        %341 = vmatprep.subr.mxu0 0.0
        %342 = vmatpush1.xpose.msra.mxu0 0.0
        %343 = vmatprep.subr.mxu0 0.0
        %344 = vmatpush1.xpose.msra.mxu0 0.0
        %345 = vmatprep.subr.mxu0 0.0
        %346 = vmatpush1.xpose.msra.mxu0 0.0
        %347 = vmatprep.subr.mxu0 0.0
        %348 = vmatpush1.xpose.msra.mxu0 0.0
        %349 = vmatprep.subr.mxu0 0.0
        %350 = vmatpush1.xpose.msra.mxu0 0.0
        %351 = vmatprep.subr.mxu0 0.0
        %352 = vmatpush1.xpose.msra.mxu0 0.0
        %353 = vmatprep.subr.mxu0 0.0
        %354 = vmatpush1.xpose.msra.mxu0 0.0
        %355 = vmatprep.subr.mxu0 0.0
        %356 = vmatpush1.xpose.msra.mxu0 0.0
        %357 = vmatprep.subr.mxu0 0.0
        %358 = vmatpush1.xpose.msra.mxu0 0.0
        %359 = vmatprep.subr.mxu0 0.0
        %360 = vmatpush1.xpose.msra.mxu0 0.0
        %361 = vmatprep.subr.mxu0 0.0
        %362 = vmatpush1.xpose.msra.mxu0 0.0
        %363 = vmatprep.subr.mxu0 0.0
        %364 = vmatpush1.xpose.msra.mxu0 0.0
        %365 = vmatprep.subr.mxu0 0.0
        %366 = vmatpush1.xpose.msra.mxu0 0.0
        %367 = vmatprep.subr.mxu0 0.0
        %368 = vmatpush1.xpose.msra.mxu0 0.0
        %369 = vmatprep.subr.mxu0 0.0
        %370 = vmatpush1.xpose.msra.mxu0 0.0
        %371 = vmatprep.subr.mxu0 0.0
        %372 = vmatpush1.xpose.msra.mxu0 0.0
        %373 = vmatprep.subr.mxu0 0.0
        %374 = vmatpush1.xpose.msra.mxu0 0.0
        %375 = vmatprep.subr.mxu0 0.0
        %376 = vmatpush1.xpose.msra.mxu0 0.0
        %377 = vmatprep.subr.mxu0 0.0
        %378 = vmatpush1.xpose.msra.mxu0 0.0
        %379 = vmatprep.subr.mxu0 0.0
        %380 = vmatpush1.xpose.msra.mxu0 0.0
        %381 = vmatprep.subr.mxu0 0.0
        %382 = vmatpush1.xpose.msra.mxu0 0.0
        %383 = vmatprep.subr.mxu0 0.0
        %384 = vmatpush1.xpose.msra.mxu0 0.0
        %385 = vmatprep.subr.mxu0 0.0
        %386 = vmatpush1.xpose.msra.mxu0 0.0
        %387 = vmatprep.subr.mxu0 0.0
        %388 = vmatpush1.xpose.msra.mxu0 0.0
        %389 = vmatprep.subr.mxu0 0.0
        %390 = vmatpush1.xpose.msra.mxu0 0.0
        %391 = vmatprep.subr.mxu0 0.0
        %392 = vmatpush1.xpose.msra.mxu0 0.0
        %393 = vmatprep.subr.mxu0 0.0
        %394 = vmatpush1.xpose.msra.mxu0 0.0
        %395 = vmatprep.subr.mxu0 0.0
        %396 = vmatpush1.xpose.msra.mxu0 0.0
        %397 = vmatprep.subr.mxu0 0.0
        %398 = vmatpush1.xpose.msra.mxu0 0.0
        %399 = vmatprep.subr.mxu0 0.0
        %400 = vmatpush1.xpose.msra.mxu0 0.0
        %401 = vmatprep.mubr.f32.mxu0 0.0
        %402 = vmatmul.mubr.f32.gmra.mrb[0].mxu0 %v332
        %v403 = vpop.f32.mrb[0].mxu0
        %v404 = vadd.f32 0.0, %v403
        %v405 = vpop.f32.mrb[0].mxu0
        %406 = vdwg.mxu0
        %v408 = vsel %vm330, %v327, 0
        %v411 = vsel %vm330, %v319, 0
        %413 = vmatprep.subr.mxu0 0.0
        %414 = vmatpush1.xpose.msra.mxu0 %v411
        %415 = vmatprep.subr.mxu0 0.0
        %416 = vmatpush1.xpose.msra.mxu0 0.0
        %417 = vmatprep.subr.mxu0 0.0
        %418 = vmatpush1.xpose.msra.mxu0 0.0
        %419 = vmatprep.subr.mxu0 0.0
        %420 = vmatpush1.xpose.msra.mxu0 0.0
        %421 = vmatprep.subr.mxu0 0.0
        %422 = vmatpush1.xpose.msra.mxu0 0.0
        %423 = vmatprep.subr.mxu0 0.0
        %424 = vmatpush1.xpose.msra.mxu0 0.0
        %425 = vmatprep.subr.mxu0 0.0
        %426 = vmatpush1.xpose.msra.mxu0 0.0
        %427 = vmatprep.subr.mxu0 0.0
        %428 = vmatpush1.xpose.msra.mxu0 0.0
        %429 = vmatprep.subr.mxu0 0.0
        %430 = vmatpush1.xpose.msra.mxu0 0.0
        %431 = vmatprep.subr.mxu0 0.0
        %432 = vmatpush1.xpose.msra.mxu0 0.0
        %433 = vmatprep.subr.mxu0 0.0
        %434 = vmatpush1.xpose.msra.mxu0 0.0
        %435 = vmatprep.subr.mxu0 0.0
        %436 = vmatpush1.xpose.msra.mxu0 0.0
        %437 = vmatprep.subr.mxu0 0.0
        %438 = vmatpush1.xpose.msra.mxu0 0.0
        %439 = vmatprep.subr.mxu0 0.0
        %440 = vmatpush1.xpose.msra.mxu0 0.0
        %441 = vmatprep.subr.mxu0 0.0
        %442 = vmatpush1.xpose.msra.mxu0 0.0
        %443 = vmatprep.subr.mxu0 0.0
        %444 = vmatpush1.xpose.msra.mxu0 0.0
        %445 = vmatprep.subr.mxu0 0.0
        %446 = vmatpush1.xpose.msra.mxu0 0.0
        %447 = vmatprep.subr.mxu0 0.0
        %448 = vmatpush1.xpose.msra.mxu0 0.0
        %449 = vmatprep.subr.mxu0 0.0
        %450 = vmatpush1.xpose.msra.mxu0 0.0
        %451 = vmatprep.subr.mxu0 0.0
        %452 = vmatpush1.xpose.msra.mxu0 0.0
        %453 = vmatprep.subr.mxu0 0.0
        %454 = vmatpush1.xpose.msra.mxu0 0.0
        %455 = vmatprep.subr.mxu0 0.0
        %456 = vmatpush1.xpose.msra.mxu0 0.0
        %457 = vmatprep.subr.mxu0 0.0
        %458 = vmatpush1.xpose.msra.mxu0 0.0
        %459 = vmatprep.subr.mxu0 0.0
        %460 = vmatpush1.xpose.msra.mxu0 0.0
        %461 = vmatprep.subr.mxu0 0.0
        %462 = vmatpush1.xpose.msra.mxu0 0.0
        %463 = vmatprep.subr.mxu0 0.0
        %464 = vmatpush1.xpose.msra.mxu0 0.0
        %465 = vmatprep.subr.mxu0 0.0
        %466 = vmatpush1.xpose.msra.mxu0 0.0
        %467 = vmatprep.subr.mxu0 0.0
        %468 = vmatpush1.xpose.msra.mxu0 0.0
        %469 = vmatprep.subr.mxu0 0.0
        %470 = vmatpush1.xpose.msra.mxu0 0.0
        %471 = vmatprep.subr.mxu0 0.0
        %472 = vmatpush1.xpose.msra.mxu0 0.0
        %473 = vmatprep.subr.mxu0 0.0
        %474 = vmatpush1.xpose.msra.mxu0 0.0
        %475 = vmatprep.subr.mxu0 0.0
        %476 = vmatpush1.xpose.msra.mxu0 0.0
        %477 = vmatprep.mubr.f32.mxu0 0.0
        %478 = vmatmul.mubr.f32.gmra.mrb[0].mxu0 %v408
        %v479 = vpop.f32.mrb[0].mxu0
        %v480 = vadd.f32 0.0, %v479
        %v481 = vpop.f32.mrb[0].mxu0
        %482 = vdwg.mxu0
        %v484 = vsel %vm330, %v328, 0
        %v487 = vsel %vm330, %v320, 0
        %489 = vmatprep.subr.mxu0 0.0
        %490 = vmatpush1.xpose.msra.mxu0 %v487
        %491 = vmatprep.subr.mxu0 0.0
        %492 = vmatpush1.xpose.msra.mxu0 0.0
        %493 = vmatprep.subr.mxu0 0.0
        %494 = vmatpush1.xpose.msra.mxu0 0.0
        %495 = vmatprep.subr.mxu0 0.0
        %496 = vmatpush1.xpose.msra.mxu0 0.0
        %497 = vmatprep.subr.mxu0 0.0
        %498 = vmatpush1.xpose.msra.mxu0 0.0
        %499 = vmatprep.subr.mxu0 0.0
        %500 = vmatpush1.xpose.msra.mxu0 0.0
        %501 = vmatprep.subr.mxu0 0.0
        %502 = vmatpush1.xpose.msra.mxu0 0.0
        %503 = vmatprep.subr.mxu0 0.0
        %504 = vmatpush1.xpose.msra.mxu0 0.0
        %505 = vmatprep.subr.mxu0 0.0
        %506 = vmatpush1.xpose.msra.mxu0 0.0
        %507 = vmatprep.subr.mxu0 0.0
        %508 = vmatpush1.xpose.msra.mxu0 0.0
        %509 = vmatprep.subr.mxu0 0.0
        %510 = vmatpush1.xpose.msra.mxu0 0.0
        %511 = vmatprep.subr.mxu0 0.0
        %512 = vmatpush1.xpose.msra.mxu0 0.0
        %513 = vmatprep.subr.mxu0 0.0
        %514 = vmatpush1.xpose.msra.mxu0 0.0
        %515 = vmatprep.subr.mxu0 0.0
        %516 = vmatpush1.xpose.msra.mxu0 0.0
        %517 = vmatprep.subr.mxu0 0.0
        %518 = vmatpush1.xpose.msra.mxu0 0.0
        %519 = vmatprep.subr.mxu0 0.0
        %520 = vmatpush1.xpose.msra.mxu0 0.0
        %521 = vmatprep.subr.mxu0 0.0
        %522 = vmatpush1.xpose.msra.mxu0 0.0
        %523 = vmatprep.subr.mxu0 0.0
        %524 = vmatpush1.xpose.msra.mxu0 0.0
        %525 = vmatprep.subr.mxu0 0.0
        %526 = vmatpush1.xpose.msra.mxu0 0.0
        %527 = vmatprep.subr.mxu0 0.0
        %528 = vmatpush1.xpose.msra.mxu0 0.0
        %529 = vmatprep.subr.mxu0 0.0
        %530 = vmatpush1.xpose.msra.mxu0 0.0
        %531 = vmatprep.subr.mxu0 0.0
        %532 = vmatpush1.xpose.msra.mxu0 0.0
        %533 = vmatprep.subr.mxu0 0.0
        %534 = vmatpush1.xpose.msra.mxu0 0.0
        %535 = vmatprep.subr.mxu0 0.0
        %536 = vmatpush1.xpose.msra.mxu0 0.0
        %537 = vmatprep.subr.mxu0 0.0
        %538 = vmatpush1.xpose.msra.mxu0 0.0
        %539 = vmatprep.subr.mxu0 0.0
        %540 = vmatpush1.xpose.msra.mxu0 0.0
        %541 = vmatprep.subr.mxu0 0.0
        %542 = vmatpush1.xpose.msra.mxu0 0.0
        %543 = vmatprep.subr.mxu0 0.0
        %544 = vmatpush1.xpose.msra.mxu0 0.0
        %545 = vmatprep.subr.mxu0 0.0
        %546 = vmatpush1.xpose.msra.mxu0 0.0
        %547 = vmatprep.subr.mxu0 0.0
        %548 = vmatpush1.xpose.msra.mxu0 0.0
        %549 = vmatprep.subr.mxu0 0.0
        %550 = vmatpush1.xpose.msra.mxu0 0.0
        %551 = vmatprep.subr.mxu0 0.0
        %552 = vmatpush1.xpose.msra.mxu0 0.0
        %553 = vmatprep.mubr.f32.mxu0 0.0
        %554 = vmatmul.mubr.f32.gmra.mrb[0].mxu0 %v484
        %v555 = vpop.f32.mrb[0].mxu0
        %v556 = vadd.f32 0.0, %v555
        %v557 = vpop.f32.mrb[0].mxu0
        %558 = vdwg.mxu0
        %v560 = vsel %vm330, %v329, 0
        %v563 = vsel %vm330, %v321, 0
        %565 = vmatprep.subr.mxu0 0.0
        %566 = vmatpush1.xpose.msra.mxu0 %v563
        %567 = vmatprep.subr.mxu0 0.0
        %568 = vmatpush1.xpose.msra.mxu0 0.0
        %569 = vmatprep.subr.mxu0 0.0
        %570 = vmatpush1.xpose.msra.mxu0 0.0
        %571 = vmatprep.subr.mxu0 0.0
        %572 = vmatpush1.xpose.msra.mxu0 0.0
        %573 = vmatprep.subr.mxu0 0.0
        %574 = vmatpush1.xpose.msra.mxu0 0.0
        %575 = vmatprep.subr.mxu0 0.0
        %576 = vmatpush1.xpose.msra.mxu0 0.0
        %577 = vmatprep.subr.mxu0 0.0
        %578 = vmatpush1.xpose.msra.mxu0 0.0
        %579 = vmatprep.subr.mxu0 0.0
        %580 = vmatpush1.xpose.msra.mxu0 0.0
        %581 = vmatprep.subr.mxu0 0.0
        %582 = vmatpush1.xpose.msra.mxu0 0.0
        %583 = vmatprep.subr.mxu0 0.0
        %584 = vmatpush1.xpose.msra.mxu0 0.0
        %585 = vmatprep.subr.mxu0 0.0
        %586 = vmatpush1.xpose.msra.mxu0 0.0
        %587 = vmatprep.subr.mxu0 0.0
        %588 = vmatpush1.xpose.msra.mxu0 0.0
        %589 = vmatprep.subr.mxu0 0.0
        %590 = vmatpush1.xpose.msra.mxu0 0.0
        %591 = vmatprep.subr.mxu0 0.0
        %592 = vmatpush1.xpose.msra.mxu0 0.0
        %593 = vmatprep.subr.mxu0 0.0
        %594 = vmatpush1.xpose.msra.mxu0 0.0
        %595 = vmatprep.subr.mxu0 0.0
        %596 = vmatpush1.xpose.msra.mxu0 0.0
        %597 = vmatprep.subr.mxu0 0.0
        %598 = vmatpush1.xpose.msra.mxu0 0.0
        %599 = vmatprep.subr.mxu0 0.0
        %600 = vmatpush1.xpose.msra.mxu0 0.0
        %601 = vmatprep.subr.mxu0 0.0
        %602 = vmatpush1.xpose.msra.mxu0 0.0
        %603 = vmatprep.subr.mxu0 0.0
        %604 = vmatpush1.xpose.msra.mxu0 0.0
        %605 = vmatprep.subr.mxu0 0.0
        %606 = vmatpush1.xpose.msra.mxu0 0.0
        %607 = vmatprep.subr.mxu0 0.0
        %608 = vmatpush1.xpose.msra.mxu0 0.0
        %609 = vmatprep.subr.mxu0 0.0
        %610 = vmatpush1.xpose.msra.mxu0 0.0
        %611 = vmatprep.subr.mxu0 0.0
        %612 = vmatpush1.xpose.msra.mxu0 0.0
        %613 = vmatprep.subr.mxu0 0.0
        %614 = vmatpush1.xpose.msra.mxu0 0.0
        %615 = vmatprep.subr.mxu0 0.0
        %616 = vmatpush1.xpose.msra.mxu0 0.0
        %617 = vmatprep.subr.mxu0 0.0
        %618 = vmatpush1.xpose.msra.mxu0 0.0
        %619 = vmatprep.subr.mxu0 0.0
        %620 = vmatpush1.xpose.msra.mxu0 0.0
        %621 = vmatprep.subr.mxu0 0.0
        %622 = vmatpush1.xpose.msra.mxu0 0.0
        %623 = vmatprep.subr.mxu0 0.0
        %624 = vmatpush1.xpose.msra.mxu0 0.0
        %625 = vmatprep.subr.mxu0 0.0
        %626 = vmatpush1.xpose.msra.mxu0 0.0
        %627 = vmatprep.subr.mxu0 0.0
        %628 = vmatpush1.xpose.msra.mxu0 0.0
        %629 = vmatprep.mubr.f32.mxu0 0.0
        %630 = vmatmul.mubr.f32.gmra.mrb[0].mxu0 %v560
        %v631 = vpop.f32.mrb[0].mxu0
        %v632 = vadd.f32 0.0, %v631
        %v633 = vpop.f32.mrb[0].mxu0
        %634 = vdwg.mxu0
        %v635 = vld [vmem:[#allocation2] sm:$0xff]
        %v636 = vld [vmem:[#allocation2 + $0x8] sm:$0xff]
        %v637 = vld [vmem:[#allocation2 + $0x10] sm:$0xff]
        %v638 = vld [vmem:[#allocation2 + $0x18] sm:$0xff]
        %vm639 = vcmask 64512
        %v640 = vsel %vm639, %v404, -inf
        %641 = vmax.xlane.f32.xlu0 %v640
        %v642 = vpop.xlane.xlu0 %641
        %v643 = vsel %vm639, %v480, -inf
        %644 = vmax.xlane.f32.xlu0 %v643
        %v645 = vpop.xlane.xlu0 %644
        %v646 = vsel %vm639, %v556, -inf
        %647 = vmax.xlane.f32.xlu0 %v646
        %v648 = vpop.xlane.xlu0 %647
        %v649 = vsel %vm639, %v632, -inf
        %650 = vmax.xlane.f32.xlu0 %v649
        %v651 = vpop.xlane.xlu0 %650
        %v652 = vmax.f32 %v635, %v642
        %v653 = vmax.f32 %v636, %v645
        %v654 = vmax.f32 %v637, %v648
        %v655 = vmax.f32 %v638, %v651
        %v656 = vsub.f32 %v635, %v652
        %v657 = vsub.f32 %v636, %v653
        %v658 = vsub.f32 %v637, %v654
        %v659 = vsub.f32 %v638, %v655
        %v660 = vmul.f32 %v656, 1.442695
        %v661 = vpow.pop %v660
        %v662 = vmul.f32 %v657, 1.442695
        %v663 = vpow.pop %v662
        %v664 = vmul.f32 %v658, 1.442695
        %v665 = vpow.pop %v664
        %v666 = vmul.f32 %v659, 1.442695
        %v667 = vpow.pop %v666
        %669 = vset.pattern.permute.xlu0 0
        %670 = vperm.xlu0 %669, %v652
        %v671 = vpop.permute.xlu0 %670
        %674 = vset.pattern.permute.xlu0 0
        %675 = vperm.xlu0 %674, %v653
        %v676 = vpop.permute.xlu0 %675
        %679 = vset.pattern.permute.xlu0 0
        %680 = vperm.xlu0 %679, %v654
        %v681 = vpop.permute.xlu0 %680
        %684 = vset.pattern.permute.xlu0 0
        %685 = vperm.xlu0 %684, %v655
        %v686 = vpop.permute.xlu0 %685
        %v688 = vsub.f32 %v404, %v671
        %v689 = vsub.f32 %v480, %v676
        %v690 = vsub.f32 %v556, %v681
        %v691 = vsub.f32 %v632, %v686
        %v692 = vmul.f32 %v688, 1.442695
        %v693 = vpow.pop %v692
        %v694 = vmul.f32 %v689, 1.442695
        %v695 = vpow.pop %v694
        %v696 = vmul.f32 %v690, 1.442695
        %v697 = vpow.pop %v696
        %v698 = vmul.f32 %v691, 1.442695
        %v699 = vpow.pop %v698
        %v700 = vld [vmem:[#allocation3] sm:$0xff]
        %v701 = vld [vmem:[#allocation3 + $0x8] sm:$0xff]
        %v702 = vld [vmem:[#allocation3 + $0x10] sm:$0xff]
        %v703 = vld [vmem:[#allocation3 + $0x18] sm:$0xff]
        %v704 = vmul.f32 %v661, %v700
        %v705 = vmul.f32 %v663, %v701
        %v706 = vmul.f32 %v665, %v702
        %v707 = vmul.f32 %v667, %v703
        %v708 = vsel %vm639, %v693, 0.0
        %709 = vadd.xlane.f32.xlu0 %v708
        %v710 = vpop.xlane.xlu0 %709
        %v711 = vsel %vm639, %v695, 0.0
        %712 = vadd.xlane.f32.xlu0 %v711
        %v713 = vpop.xlane.xlu0 %712
        %v714 = vsel %vm639, %v697, 0.0
        %715 = vadd.xlane.f32.xlu0 %v714
        %v716 = vpop.xlane.xlu0 %715
        %v717 = vsel %vm639, %v699, 0.0
        %718 = vadd.xlane.f32.xlu0 %v717
        %v719 = vpop.xlane.xlu0 %718
        %v720 = vadd.f32 %v704, %v710
        %v721 = vadd.f32 %v705, %v713
        %v722 = vadd.f32 %v706, %v716
        %v723 = vadd.f32 %v707, %v719
        %vm724 = vcmask 7168
        %725 = vst.msk [vmem:[#allocation3] sm:$0xff] %vm724, %v720
        %726 = vst.msk [vmem:[#allocation3 + $0x8] sm:$0xff] %vm724, %v721
        %727 = vst.msk [vmem:[#allocation3 + $0x10] sm:$0xff] %vm724, %v722
        %728 = vst.msk [vmem:[#allocation3 + $0x18] sm:$0xff] %vm724, %v723
        %v729 = vld [vmem:[#allocation4] sm:$0xff]
        %v730 = vld [vmem:[#allocation4 + $0x8] sm:$0xff]
        %v731 = vld [vmem:[#allocation4 + $0x10] sm:$0xff]
        %v732 = vld [vmem:[#allocation4 + $0x18] sm:$0xff]
        %734 = vset.pattern.permute.xlu0 0
        %735 = vperm.xlu0 %734, %v661
        %v736 = vpop.permute.xlu0 %735
        %739 = vset.pattern.permute.xlu0 0
        %740 = vperm.xlu0 %739, %v663
        %v741 = vpop.permute.xlu0 %740
        %744 = vset.pattern.permute.xlu0 0
        %745 = vperm.xlu0 %744, %v665
        %v746 = vpop.permute.xlu0 %745
        %749 = vset.pattern.permute.xlu0 0
        %750 = vperm.xlu0 %749, %v667
        %v751 = vpop.permute.xlu0 %750
        %v753 = vmul.f32 %v736, %v729
        %v754 = vmul.f32 %v741, %v730
        %v755 = vmul.f32 %v746, %v731
        %v756 = vmul.f32 %v751, %v732
        %v758 = vsel %vm639, %v693, 0
        %760 = vmatprep.subr.mxu0 0.0
        %761 = vmatpush1.msra.mxu0 %v322
        %762 = vmatprep.subr.mxu0 0.0
        %763 = vmatpush1.msra.mxu0 0.0
        %764 = vmatprep.subr.mxu0 0.0
        %765 = vmatpush1.msra.mxu0 0.0
        %766 = vmatprep.subr.mxu0 0.0
        %767 = vmatpush1.msra.mxu0 0.0
        %768 = vmatprep.subr.mxu0 0.0
        %769 = vmatpush1.msra.mxu0 0.0
        %770 = vmatprep.subr.mxu0 0.0
        %771 = vmatpush1.msra.mxu0 0.0
        %772 = vmatprep.subr.mxu0 0.0
        %773 = vmatpush1.msra.mxu0 0.0
        %774 = vmatprep.subr.mxu0 0.0
        %775 = vmatpush1.msra.mxu0 0.0
        %776 = vmatprep.subr.mxu0 0.0
        %777 = vmatpush1.msra.mxu0 0.0
        %778 = vmatprep.subr.mxu0 0.0
        %779 = vmatpush1.msra.mxu0 0.0
        %780 = vmatprep.subr.mxu0 0.0
        %781 = vmatpush1.msra.mxu0 0.0
        %782 = vmatprep.subr.mxu0 0.0
        %783 = vmatpush1.msra.mxu0 0.0
        %784 = vmatprep.subr.mxu0 0.0
        %785 = vmatpush1.msra.mxu0 0.0
        %786 = vmatprep.subr.mxu0 0.0
        %787 = vmatpush1.msra.mxu0 0.0
        %788 = vmatprep.subr.mxu0 0.0
        %789 = vmatpush1.msra.mxu0 0.0
        %790 = vmatprep.subr.mxu0 0.0
        %791 = vmatpush1.msra.mxu0 0.0
        %792 = vmatprep.subr.mxu0 0.0
        %793 = vmatpush1.msra.mxu0 0.0
        %794 = vmatprep.subr.mxu0 0.0
        %795 = vmatpush1.msra.mxu0 0.0
        %796 = vmatprep.subr.mxu0 0.0
        %797 = vmatpush1.msra.mxu0 0.0
        %798 = vmatprep.subr.mxu0 0.0
        %799 = vmatpush1.msra.mxu0 0.0
        %800 = vmatprep.subr.mxu0 0.0
        %801 = vmatpush1.msra.mxu0 0.0
        %802 = vmatprep.subr.mxu0 0.0
        %803 = vmatpush1.msra.mxu0 0.0
        %804 = vmatprep.subr.mxu0 0.0
        %805 = vmatpush1.msra.mxu0 0.0
        %806 = vmatprep.subr.mxu0 0.0
        %807 = vmatpush1.msra.mxu0 0.0
        %808 = vmatprep.subr.mxu0 0.0
        %809 = vmatpush1.msra.mxu0 0.0
        %810 = vmatprep.subr.mxu0 0.0
        %811 = vmatpush1.msra.mxu0 0.0
        %812 = vmatprep.subr.mxu0 0.0
        %813 = vmatpush1.msra.mxu0 0.0
        %814 = vmatprep.subr.mxu0 0.0
        %815 = vmatpush1.msra.mxu0 0.0
        %816 = vmatprep.subr.mxu0 0.0
        %817 = vmatpush1.msra.mxu0 0.0
        %818 = vmatprep.subr.mxu0 0.0
        %819 = vmatpush1.msra.mxu0 0.0
        %820 = vmatprep.subr.mxu0 0.0
        %821 = vmatpush1.msra.mxu0 0.0
        %822 = vmatprep.subr.mxu0 0.0
        %823 = vmatpush1.msra.mxu0 0.0
        %824 = vmatprep.mubr.f32.mxu0 0.0
        %825 = vmatmul.mubr.f32.gmra.mrb[0].mxu0 %v758
        %v826 = vpop.f32.mrb[0].mxu0
        %v827 = vadd.f32 0.0, %v826
        %v828 = vpop.f32.mrb[0].mxu0
        %829 = vdwg.mxu0
        %v831 = vsel %vm639, %v695, 0
        %833 = vmatprep.subr.mxu0 0.0
        %834 = vmatpush1.msra.mxu0 %v323
        %835 = vmatprep.subr.mxu0 0.0
        %836 = vmatpush1.msra.mxu0 0.0
        %837 = vmatprep.subr.mxu0 0.0
        %838 = vmatpush1.msra.mxu0 0.0
        %839 = vmatprep.subr.mxu0 0.0
        %840 = vmatpush1.msra.mxu0 0.0
        %841 = vmatprep.subr.mxu0 0.0
        %842 = vmatpush1.msra.mxu0 0.0
        %843 = vmatprep.subr.mxu0 0.0
        %844 = vmatpush1.msra.mxu0 0.0
        %845 = vmatprep.subr.mxu0 0.0
        %846 = vmatpush1.msra.mxu0 0.0
        %847 = vmatprep.subr.mxu0 0.0
        %848 = vmatpush1.msra.mxu0 0.0
        %849 = vmatprep.subr.mxu0 0.0
        %850 = vmatpush1.msra.mxu0 0.0
        %851 = vmatprep.subr.mxu0 0.0
        %852 = vmatpush1.msra.mxu0 0.0
        %853 = vmatprep.subr.mxu0 0.0
        %854 = vmatpush1.msra.mxu0 0.0
        %855 = vmatprep.subr.mxu0 0.0
        %856 = vmatpush1.msra.mxu0 0.0
        %857 = vmatprep.subr.mxu0 0.0
        %858 = vmatpush1.msra.mxu0 0.0
        %859 = vmatprep.subr.mxu0 0.0
        %860 = vmatpush1.msra.mxu0 0.0
        %861 = vmatprep.subr.mxu0 0.0
        %862 = vmatpush1.msra.mxu0 0.0
        %863 = vmatprep.subr.mxu0 0.0
        %864 = vmatpush1.msra.mxu0 0.0
        %865 = vmatprep.subr.mxu0 0.0
        %866 = vmatpush1.msra.mxu0 0.0
        %867 = vmatprep.subr.mxu0 0.0
        %868 = vmatpush1.msra.mxu0 0.0
        %869 = vmatprep.subr.mxu0 0.0
        %870 = vmatpush1.msra.mxu0 0.0
        %871 = vmatprep.subr.mxu0 0.0
        %872 = vmatpush1.msra.mxu0 0.0
        %873 = vmatprep.subr.mxu0 0.0
        %874 = vmatpush1.msra.mxu0 0.0
        %875 = vmatprep.subr.mxu0 0.0
        %876 = vmatpush1.msra.mxu0 0.0
        %877 = vmatprep.subr.mxu0 0.0
        %878 = vmatpush1.msra.mxu0 0.0
        %879 = vmatprep.subr.mxu0 0.0
        %880 = vmatpush1.msra.mxu0 0.0
        %881 = vmatprep.subr.mxu0 0.0
        %882 = vmatpush1.msra.mxu0 0.0
        %883 = vmatprep.subr.mxu0 0.0
        %884 = vmatpush1.msra.mxu0 0.0
        %885 = vmatprep.subr.mxu0 0.0
        %886 = vmatpush1.msra.mxu0 0.0
        %887 = vmatprep.subr.mxu0 0.0
        %888 = vmatpush1.msra.mxu0 0.0
        %889 = vmatprep.subr.mxu0 0.0
        %890 = vmatpush1.msra.mxu0 0.0
        %891 = vmatprep.subr.mxu0 0.0
        %892 = vmatpush1.msra.mxu0 0.0
        %893 = vmatprep.subr.mxu0 0.0
        %894 = vmatpush1.msra.mxu0 0.0
        %895 = vmatprep.subr.mxu0 0.0
        %896 = vmatpush1.msra.mxu0 0.0
        %897 = vmatprep.mubr.f32.mxu0 0.0
        %898 = vmatmul.mubr.f32.gmra.mrb[0].mxu0 %v831
        %v899 = vpop.f32.mrb[0].mxu0
        %v900 = vadd.f32 0.0, %v899
        %v901 = vpop.f32.mrb[0].mxu0
        %902 = vdwg.mxu0
        %v904 = vsel %vm639, %v697, 0
        %906 = vmatprep.subr.mxu0 0.0
        %907 = vmatpush1.msra.mxu0 %v324
        %908 = vmatprep.subr.mxu0 0.0
        %909 = vmatpush1.msra.mxu0 0.0
        %910 = vmatprep.subr.mxu0 0.0
        %911 = vmatpush1.msra.mxu0 0.0
        %912 = vmatprep.subr.mxu0 0.0
        %913 = vmatpush1.msra.mxu0 0.0
        %914 = vmatprep.subr.mxu0 0.0
        %915 = vmatpush1.msra.mxu0 0.0
        %916 = vmatprep.subr.mxu0 0.0
        %917 = vmatpush1.msra.mxu0 0.0
        %918 = vmatprep.subr.mxu0 0.0
        %919 = vmatpush1.msra.mxu0 0.0
        %920 = vmatprep.subr.mxu0 0.0
        %921 = vmatpush1.msra.mxu0 0.0
        %922 = vmatprep.subr.mxu0 0.0
        %923 = vmatpush1.msra.mxu0 0.0
        %924 = vmatprep.subr.mxu0 0.0
        %925 = vmatpush1.msra.mxu0 0.0
        %926 = vmatprep.subr.mxu0 0.0
        %927 = vmatpush1.msra.mxu0 0.0
        %928 = vmatprep.subr.mxu0 0.0
        %929 = vmatpush1.msra.mxu0 0.0
        %930 = vmatprep.subr.mxu0 0.0
        %931 = vmatpush1.msra.mxu0 0.0
        %932 = vmatprep.subr.mxu0 0.0
        %933 = vmatpush1.msra.mxu0 0.0
        %934 = vmatprep.subr.mxu0 0.0
        %935 = vmatpush1.msra.mxu0 0.0
        %936 = vmatprep.subr.mxu0 0.0
        %937 = vmatpush1.msra.mxu0 0.0
        %938 = vmatprep.subr.mxu0 0.0
        %939 = vmatpush1.msra.mxu0 0.0
        %940 = vmatprep.subr.mxu0 0.0
        %941 = vmatpush1.msra.mxu0 0.0
        %942 = vmatprep.subr.mxu0 0.0
        %943 = vmatpush1.msra.mxu0 0.0
        %944 = vmatprep.subr.mxu0 0.0
        %945 = vmatpush1.msra.mxu0 0.0
        %946 = vmatprep.subr.mxu0 0.0
        %947 = vmatpush1.msra.mxu0 0.0
        %948 = vmatprep.subr.mxu0 0.0
        %949 = vmatpush1.msra.mxu0 0.0
        %950 = vmatprep.subr.mxu0 0.0
        %951 = vmatpush1.msra.mxu0 0.0
        %952 = vmatprep.subr.mxu0 0.0
        %953 = vmatpush1.msra.mxu0 0.0
        %954 = vmatprep.subr.mxu0 0.0
        %955 = vmatpush1.msra.mxu0 0.0
        %956 = vmatprep.subr.mxu0 0.0
        %957 = vmatpush1.msra.mxu0 0.0
        %958 = vmatprep.subr.mxu0 0.0
        %959 = vmatpush1.msra.mxu0 0.0
        %960 = vmatprep.subr.mxu0 0.0
        %961 = vmatpush1.msra.mxu0 0.0
        %962 = vmatprep.subr.mxu0 0.0
        %963 = vmatpush1.msra.mxu0 0.0
        %964 = vmatprep.subr.mxu0 0.0
        %965 = vmatpush1.msra.mxu0 0.0
        %966 = vmatprep.subr.mxu0 0.0
        %967 = vmatpush1.msra.mxu0 0.0
        %968 = vmatprep.subr.mxu0 0.0
        %969 = vmatpush1.msra.mxu0 0.0
        %970 = vmatprep.mubr.f32.mxu0 0.0
        %971 = vmatmul.mubr.f32.gmra.mrb[0].mxu0 %v904
        %v972 = vpop.f32.mrb[0].mxu0
        %v973 = vadd.f32 0.0, %v972
        %v974 = vpop.f32.mrb[0].mxu0
        %975 = vdwg.mxu0
        %v977 = vsel %vm639, %v699, 0
        %979 = vmatprep.subr.mxu0 0.0
        %980 = vmatpush1.msra.mxu0 %v325
        %981 = vmatprep.subr.mxu0 0.0
        %982 = vmatpush1.msra.mxu0 0.0
        %983 = vmatprep.subr.mxu0 0.0
        %984 = vmatpush1.msra.mxu0 0.0
        %985 = vmatprep.subr.mxu0 0.0
        %986 = vmatpush1.msra.mxu0 0.0
        %987 = vmatprep.subr.mxu0 0.0
        %988 = vmatpush1.msra.mxu0 0.0
        %989 = vmatprep.subr.mxu0 0.0
        %990 = vmatpush1.msra.mxu0 0.0
        %991 = vmatprep.subr.mxu0 0.0
        %992 = vmatpush1.msra.mxu0 0.0
        %993 = vmatprep.subr.mxu0 0.0
        %994 = vmatpush1.msra.mxu0 0.0
        %995 = vmatprep.subr.mxu0 0.0
        %996 = vmatpush1.msra.mxu0 0.0
        %997 = vmatprep.subr.mxu0 0.0
        %998 = vmatpush1.msra.mxu0 0.0
        %999 = vmatprep.subr.mxu0 0.0
        %1000 = vmatpush1.msra.mxu0 0.0
        %1001 = vmatprep.subr.mxu0 0.0
        %1002 = vmatpush1.msra.mxu0 0.0
        %1003 = vmatprep.subr.mxu0 0.0
        %1004 = vmatpush1.msra.mxu0 0.0
        %1005 = vmatprep.subr.mxu0 0.0
        %1006 = vmatpush1.msra.mxu0 0.0
        %1007 = vmatprep.subr.mxu0 0.0
        %1008 = vmatpush1.msra.mxu0 0.0
        %1009 = vmatprep.subr.mxu0 0.0
        %1010 = vmatpush1.msra.mxu0 0.0
        %1011 = vmatprep.subr.mxu0 0.0
        %1012 = vmatpush1.msra.mxu0 0.0
        %1013 = vmatprep.subr.mxu0 0.0
        %1014 = vmatpush1.msra.mxu0 0.0
        %1015 = vmatprep.subr.mxu0 0.0
        %1016 = vmatpush1.msra.mxu0 0.0
        %1017 = vmatprep.subr.mxu0 0.0
        %1018 = vmatpush1.msra.mxu0 0.0
        %1019 = vmatprep.subr.mxu0 0.0
        %1020 = vmatpush1.msra.mxu0 0.0
        %1021 = vmatprep.subr.mxu0 0.0
        %1022 = vmatpush1.msra.mxu0 0.0
        %1023 = vmatprep.subr.mxu0 0.0
        %1024 = vmatpush1.msra.mxu0 0.0
        %1025 = vmatprep.subr.mxu0 0.0
        %1026 = vmatpush1.msra.mxu0 0.0
        %1027 = vmatprep.subr.mxu0 0.0
        %1028 = vmatpush1.msra.mxu0 0.0
        %1029 = vmatprep.subr.mxu0 0.0
        %1030 = vmatpush1.msra.mxu0 0.0
        %1031 = vmatprep.subr.mxu0 0.0
        %1032 = vmatpush1.msra.mxu0 0.0
        %1033 = vmatprep.subr.mxu0 0.0
        %1034 = vmatpush1.msra.mxu0 0.0
        %1035 = vmatprep.subr.mxu0 0.0
        %1036 = vmatpush1.msra.mxu0 0.0
        %1037 = vmatprep.subr.mxu0 0.0
        %1038 = vmatpush1.msra.mxu0 0.0
        %1039 = vmatprep.subr.mxu0 0.0
        %1040 = vmatpush1.msra.mxu0 0.0
        %1041 = vmatprep.subr.mxu0 0.0
        %1042 = vmatpush1.msra.mxu0 0.0
        %1043 = vmatprep.mubr.f32.mxu0 0.0
        %1044 = vmatmul.mubr.f32.gmra.mrb[0].mxu0 %v977
        %v1045 = vpop.f32.mrb[0].mxu0
        %v1046 = vadd.f32 0.0, %v1045
        %v1047 = vpop.f32.mrb[0].mxu0
        %1048 = vdwg.mxu0
        %v1049 = vadd.f32 %v753, %v827
        %v1050 = vadd.f32 %v754, %v900
        %v1051 = vadd.f32 %v755, %v973
        %v1052 = vadd.f32 %v756, %v1046
        %1053 = vst.msk [vmem:[#allocation4] sm:$0xff] %vm330, %v1049
        %1054 = vst.msk [vmem:[#allocation4 + $0x8] sm:$0xff] %vm330, %v1050
        %1055 = vst.msk [vmem:[#allocation4 + $0x10] sm:$0xff] %vm330, %v1051
        %1056 = vst.msk [vmem:[#allocation4 + $0x18] sm:$0xff] %vm330, %v1052
        %1057 = vst.msk [vmem:[#allocation2] sm:$0xff] %vm724, %v652
        %1058 = vst.msk [vmem:[#allocation2 + $0x8] sm:$0xff] %vm724, %v653
        %1059 = vst.msk [vmem:[#allocation2 + $0x10] sm:$0xff] %vm724, %v654
        %1060 = vst.msk [vmem:[#allocation2 + $0x18] sm:$0xff] %vm724, %v655
        // Predicated region
        $region49: #{tpu_custom_call.1} parent=31 // pred_check
          %p1061 = pneg %p296
        $region50: #{tpu_custom_call.1} parent=31 // pred_check_branch
          %1063 = sbr.rel (%p1061) target = $region52
        $region51: #{tpu_custom_call.1} parent=31 // pred_region
          %v1064 = vld [vmem:[#allocation3] sm:$0xff]
          %v1065 = vld [vmem:[#allocation3 + $0x8] sm:$0xff]
          %v1066 = vld [vmem:[#allocation3 + $0x10] sm:$0xff]
          %v1067 = vld [vmem:[#allocation3 + $0x18] sm:$0xff]
          %v1068 = vrcp.pop %v1064
          %v1069 = vrcp.pop %v1065
          %v1070 = vrcp.pop %v1066
          %v1071 = vrcp.pop %v1067
          %v1072 = vld [vmem:[#allocation4] sm:$0xff]
          %v1073 = vld [vmem:[#allocation4 + $0x8] sm:$0xff]
          %v1074 = vld [vmem:[#allocation4 + $0x10] sm:$0xff]
          %v1075 = vld [vmem:[#allocation4 + $0x18] sm:$0xff]
          %1077 = vset.pattern.permute.xlu0 0
          %1078 = vperm.xlu0 %1077, %v1068
          %v1079 = vpop.permute.xlu0 %1078
          %1082 = vset.pattern.permute.xlu0 0
          %1083 = vperm.xlu0 %1082, %v1069
          %v1084 = vpop.permute.xlu0 %1083
          %1087 = vset.pattern.permute.xlu0 0
          %1088 = vperm.xlu0 %1087, %v1070
          %v1089 = vpop.permute.xlu0 %1088
          %1092 = vset.pattern.permute.xlu0 0
          %1093 = vperm.xlu0 %1092, %v1071
          %v1094 = vpop.permute.xlu0 %1093
          %v1096 = vmul.f32 %v1072, %v1079
          %v1097 = vmul.f32 %v1073, %v1084
          %v1098 = vmul.f32 %v1074, %v1089
          %v1099 = vmul.f32 %v1075, %v1094
          %1101 = vrot.lane.b32.xlu0 %v1097, 32
          %v1102 = vpop.permute.xlu0 %1101
          %1105 = vrot.lane.b32.xlu0 %v1098, 64
          %v1106 = vpop.permute.xlu0 %1105
          %1109 = vrot.lane.b32.xlu0 %v1099, 96
          %v1110 = vpop.permute.xlu0 %1109
          %v1112 = vsel %vm330, %v1096, %v1102
          %vm1113 = vcmask 523264
          %v1114 = vsel %vm1113, %v1112, %v1106
          %vm1115 = vcmask 785408
          %v1116 = vsel %vm1115, %v1114, %v1110
          %1117 = vst [vmem:[%s295] sm:$0xff] %v1116
        $region52: #{tpu_custom_call.1} parent=31 // pred_fallthru
          _
        %s1118 = sand.u32 %s136, 1
        %s1119 = scalar_lea.sflag [#allocation7], %s1118
        %s1120 = sand.u32 %s136, 1
        %s1121 = smul.addr %s1120, 8
        %s1122 = scalar_lea.vmem [#allocation11], %s1121
        // Predicated region
        $region53: #{tpu_custom_call.1} parent=31 // pred_check
          %p1123 = pneg %p146
        $region54: #{tpu_custom_call.1} parent=31 // pred_check_branch
          %1125 = sbr.rel (%p1123) target = $region56
        $region55: #{tpu_custom_call.1} parent=31 // pred_region
          %s1127 = ssub.s32 128, 128
          %1128 = vsyncadd %s1119, %s1127
          %s1129 = sadd.s32 %s29, %s28
          %s1130 = smul.addr %s1129, 128
          %s1131 = scalar_lea.hbm %s3, %s1130
          %s1133 = sshll.u32 %s1122, 4
          %s1134 = int_to_ptr.vmem [resolvable:$true] %s1133
          %1136 = dma.vmem_to_hbm [thread:$0]  %s1134, 128, %s1131, %s1119
        $region56: #{tpu_custom_call.1} parent=31 // pred_fallthru
          _
      $region32: #{tpu_custom_call.1} parent=5 // pred_fallthru
        _
      %p1137 = scmp.le.s32.totalorder 2, %s18
      // Predicated region
      $region57: #{tpu_custom_call.1} parent=5 // pred_check
        %p1138 = pneg %p1137
      $region58: #{tpu_custom_call.1} parent=5 // pred_check_branch
        %1140 = sbr.rel (%p1138) target = $region60
      $region59: #{tpu_custom_call.1} parent=5 // pred_region
        %s1141 = ssub.s32 %s18, 2
        // Predicated region
        $region61: #{tpu_custom_call.1} parent=59 // pred_check
          %p1142 = pneg %p152
        $region62: #{tpu_custom_call.1} parent=59 // pred_check_branch
          %1144 = sbr.rel (%p1142) target = $region64
        $region63: #{tpu_custom_call.1} parent=59 // pred_region
          %s1145 = sand.u32 %s137, 1
          %s1146 = scalar_lea.sflag [#allocation7], %s1145
          %s1147 = sand.u32 %s137, 1
          %s1148 = smul.addr %s1147, 8
          %s1149 = scalar_lea.vmem [#allocation11], %s1148
          %1150 = dma.done %s1146, 128
        $region64: #{tpu_custom_call.1} parent=59 // pred_fallthru
          _
      $region60: #{tpu_custom_call.1} parent=5 // pred_fallthru
        _
    $region6: #{tpu_custom_call.1} parent=1 // loop_footer
      %s22 = sadd.s32 1, %s18
    $region7: #{tpu_custom_call.1} parent=1 // loop_footer_branch
      %17 = sbr.rel target = $region3
    $region8: #{tpu_custom_call.1} parent=1 // loop_exit
      _
    %1151 = vsyncpa [#allocation6], 1
    %s1152 = scalar_lea.sflag [#allocation6], 1
    %1153 = vsyncpa %s1152, 1
    %1154 = vsyncpa [#allocation9], 1
    %s1155 = scalar_lea.sflag [#allocation9], 1
    %1156 = vsyncpa %s1155, 1
    %1157 = vsyncpa [#allocation7], 1
    %s1158 = scalar_lea.sflag [#allocation7], 1
    %1159 = vsyncpa %s1158, 1

</llo_original>
